<compile_context>
chip_gen: v7x
topology: tpu7x:2x2x1
jax: 0.10.0
libtpu: 0.0.40
codegen_flags: <defaults>
</compile_context>

<pallas_src>
import functools

import jax
import jax.numpy as jnp
from jax.experimental import pallas as pl
from jax.experimental.pallas import tpu as pltpu


def _round_up(n, m):
    return ((n + m - 1) // m) * m


def _largest_divisor_leq(n, target):
    tc = max(1, min(n, target))
    while n % tc != 0:
        tc -= 1
    return tc


def _rnn_fc_kernel(x_ref, h0_ref, wih_ref, whh_ref, b_ref, wfc_ref, bfc_ref,
                   out_ref, hT_ref, h_carry, xproj_ref, *, unroll):
    """One time-chunk of the RNN recurrence + FC projection.

    x_ref    : (Tc, Bp, I)   time-major chunk of inputs (true I, no lane pad)
    h0_ref   : (Bp, Hp)      initial hidden state (padded)
    wih_ref  : (I, Hp)       W_ih^T
    whh_ref  : (Hp, Hp)      W_hh^T
    b_ref    : (1, Hp)       b_ih + b_hh
    wfc_ref  : (Hp, O)       W_fc^T (true O)
    bfc_ref  : (1, O)        b_fc
    out_ref  : (Tc, Bp, O)   chunk of per-step FC outputs
    hT_ref   : (Bp, Hp)      final hidden state (block index fixed -> resident)
    h_carry  : VMEM (Bp, Hp) f32  hidden state carried across grid steps
    xproj_ref: VMEM (Tc, Bp, Hp) f32  input projections, overwritten by h_t
    """
    Tc, Bp, I = x_ref.shape
    Hp = whh_ref.shape[0]
    O = wfc_ref.shape[1]

    # (0) First chunk: seed the carried hidden state.
    @pl.when(pl.program_id(0) == 0)
    def _():
        h_carry[...] = h0_ref[...].astype(jnp.float32)

    # (1) Hoisted input projection for the whole chunk: one (Tc*Bp, I)@(I, Hp).
    x_flat = x_ref[...].reshape(Tc * Bp, I)
    xproj_ref[...] = (
        jnp.dot(x_flat, wih_ref[...], preferred_element_type=jnp.float32)
        + b_ref[...].astype(jnp.float32)
    ).reshape(Tc, Bp, Hp)

    # (2) Sequential recurrence: only the unavoidable (Bp,Hp)@(Hp,Hp) matmul +
    #     tanh stays in the loop. h_t overwrites xproj_ref[t] in place, so no
    #     second (Tc,Bp,Hp) scratch is needed.
    # TODO(synk): W_hh is loop-invariant; pltpu.matmul_push_rhs/matmul_acc_lhs
    # could keep it resident on the MXU across steps (with an 8-row LHS the
    # per-step cost is dominated by the weight push). Kept as jnp.dot for
    # portability across v5e/v6e/v7x.
    def step(t, h_prev):
        h_new = jnp.tanh(
            xproj_ref[t]
            + jnp.dot(h_prev.astype(whh_ref.dtype), whh_ref[...],
                      preferred_element_type=jnp.float32))
        xproj_ref[t] = h_new
        return h_new

    h_last = jax.lax.fori_loop(0, Tc, step, h_carry[...], unroll=unroll)
    h_carry[...] = h_last
    hT_ref[...] = h_last   # constant block index -> flushed once at the end

    # (3) Hoisted FC projection: one (Tc*Bp, Hp)@(Hp, O) and a single store of
    #     the chunk's output at the true O width.
    h_all = xproj_ref[...].reshape(Tc * Bp, Hp)
    out_ref[...] = (
        jnp.dot(h_all.astype(wfc_ref.dtype), wfc_ref[...],
                preferred_element_type=jnp.float32)
        + bfc_ref[...].astype(jnp.float32)
    ).reshape(Tc, Bp, O)


def simple_rnn_forward(x, hidden, params, *, time_chunk=64,
                       storage_dtype=jnp.float32):
    """x: (B, T, input_size), hidden: (1, B, hidden_size).

    Returns (output (B, T, output_size), hidden (1, B, hidden_size)).
    """
    w_ih, w_hh, b_ih, b_hh, w_fc, b_fc = (
        params["w_ih"], params["w_hh"], params["b_ih"], params["b_hh"],
        params["w_fc"], params["b_fc"])

    B, T, I = x.shape
    H = w_hh.shape[0]
    O = w_fc.shape[0]

    f32 = jnp.float32
    sdt = storage_dtype

    # Pad batch to 8 sublanes and H to 128 lanes; I and O stay at their true
    # (tiny) widths. Tc must divide T so padded time steps never pollute hT.
    Bp = _round_up(B, 8)
    Hp = _round_up(H, 128)
    Tc = _largest_divisor_leq(T, time_chunk)
    n_chunks = T // Tc

    # Time-major, batch-zero-padded inputs. Zero padding is exact: padded
    # hidden columns see zero weights and padded batch rows never mix with
    # real rows (row-independent matmuls); callers slice [:B, :H].
    x_tbi = jnp.transpose(x, (1, 0, 2)).astype(sdt)                  # (T, B, I)
    x_pad = jnp.zeros((T, Bp, I), sdt).at[:, :B, :].set(x_tbi)
    h0_pad = jnp.zeros((Bp, Hp), f32).at[:B, :H].set(hidden[0].astype(f32))

    wih_p = jnp.zeros((I, Hp), sdt).at[:, :H].set(jnp.transpose(w_ih).astype(sdt))
    whh_p = jnp.zeros((Hp, Hp), sdt).at[:H, :H].set(jnp.transpose(w_hh).astype(sdt))
    b_p = jnp.zeros((1, Hp), f32).at[0, :H].set((b_ih + b_hh).astype(f32))
    wfc_p = jnp.zeros((Hp, O), sdt).at[:H, :].set(jnp.transpose(w_fc).astype(sdt))
    bfc_p = b_fc.astype(f32).reshape(1, O)

    kernel = functools.partial(_rnn_fc_kernel, unroll=min(Tc, 8))

    out_pad, h_last_pad = pl.pallas_call(
        kernel,
        out_shape=(
            jax.ShapeDtypeStruct((T, Bp, O), f32),
            jax.ShapeDtypeStruct((Bp, Hp), f32),
        ),
        grid_spec=pltpu.PrefetchScalarGridSpec(
            num_scalar_prefetch=0,
            grid=(n_chunks,),                                  # time chunks
            in_specs=[
                pl.BlockSpec((Tc, Bp, I), lambda t: (t, 0, 0)),   # x chunk
                pl.BlockSpec((Bp, Hp), lambda t: (0, 0)),         # h0
                pl.BlockSpec((I, Hp), lambda t: (0, 0)),          # W_ih^T
                pl.BlockSpec((Hp, Hp), lambda t: (0, 0)),         # W_hh^T
                pl.BlockSpec((1, Hp), lambda t: (0, 0)),          # b_ih + b_hh
                pl.BlockSpec((Hp, O), lambda t: (0, 0)),          # W_fc^T
                pl.BlockSpec((1, O), lambda t: (0, 0)),           # b_fc
            ],
            out_specs=[
                pl.BlockSpec((Tc, Bp, O), lambda t: (t, 0, 0)),   # out chunk
                pl.BlockSpec((Bp, Hp), lambda t: (0, 0)),         # final hidden
            ],
            scratch_shapes=[
                pltpu.VMEM((Bp, Hp), f32),       # carried hidden state
                pltpu.VMEM((Tc, Bp, Hp), f32),   # xproj (reused as h storage)
            ],
        ),
        compiler_params=pltpu.CompilerParams(
            dimension_semantics=("arbitrary",),   # sequential recurrence
            vmem_limit_bytes=64 * 1024 * 1024,    # > v5e's 16 MiB scoped default,
                                                  # <= v7x's 64 MiB physical
        ),
    )(x_pad, h0_pad, wih_p, whh_p, b_p, wfc_p, bfc_p)

    output = jnp.transpose(out_pad[:, :B, :], (1, 0, 2))     # (B, T, O)
    hidden_out = h_last_pad[:B, :H][None, :, :]              # (1, B, H)
    return output, hidden_out


def init_params(key, input_size, hidden_size, output_size):
    ks = jax.random.split(key, 6)
    k_rnn = 1.0 / jnp.sqrt(hidden_size)
    k_fc = 1.0 / jnp.sqrt(hidden_size)
    return {
        # PyTorch nn.RNN parameter shapes: weight_ih_l0 (H, I), weight_hh_l0 (H, H)
        "w_ih": jax.random.uniform(ks[0], (hidden_size, input_size),
                                   jnp.float32, -k_rnn, k_rnn),
        "w_hh": jax.random.uniform(ks[1], (hidden_size, hidden_size),
                                   jnp.float32, -k_rnn, k_rnn),
        "b_ih": jax.random.uniform(ks[2], (hidden_size,), jnp.float32, -k_rnn, k_rnn),
        "b_hh": jax.random.uniform(ks[3], (hidden_size,), jnp.float32, -k_rnn, k_rnn),
        # nn.Linear: weight (O, H), bias (O,)
        "w_fc": jax.random.uniform(ks[4], (output_size, hidden_size),
                                   jnp.float32, -k_fc, k_fc),
        "b_fc": jax.random.uniform(ks[5], (output_size,), jnp.float32, -k_fc, k_fc),
    }


if __name__ == "__main__":
    # x: (batch, seq, input_size), hidden: (1, batch, hidden_size)
    B, T, I, H, O = 2, 8, 4, 32, 8

    key = jax.random.PRNGKey(0)
    k_x, k_h, k_p = jax.random.split(key, 3)

    x = jax.random.normal(k_x, (B, T, I), dtype=jnp.float32)
    hidden = jax.random.normal(k_h, (1, B, H), dtype=jnp.float32)
    params = init_params(k_p, I, H, O)

    # time_chunk=4 -> grid=(2,) so the cross-chunk hidden-state carry is exercised.
    output, hidden_out = simple_rnn_forward(x, hidden, params, time_chunk=4)
    jax.block_until_ready((output, hidden_out))

    assert output.shape == (B, T, O)
    assert hidden_out.shape == (1, B, H)

    # Pure-JAX reference check of the recurrence + fc.
    def ref(x, h0, p):
        def step(h, x_t):
            h_new = jnp.tanh(x_t @ p["w_ih"].T + p["b_ih"] + h @ p["w_hh"].T + p["b_hh"])
            return h_new, h_new
        hT, hs = jax.lax.scan(step, h0[0], jnp.transpose(x, (1, 0, 2)))
        outs = hs @ p["w_fc"].T + p["b_fc"]
        return jnp.transpose(outs, (1, 0, 2)), hT[None]

    ref_out, ref_hid = ref(x, hidden, params)
    assert jnp.allclose(output, ref_out, atol=1e-5, rtol=1e-5)
    assert jnp.allclose(hidden_out, ref_hid, atol=1e-5, rtol=1e-5)

    print("KERNEL_OK")
</pallas_src>

<mosaic_0001>
module attributes {stable_mosaic.version = 11 : i64} {
  func.func @_rnn_fc_kernel(%arg0: i32, %arg1: memref<4x8x4xf32, #tpu.memory_space<vmem>>, %arg2: memref<8x128xf32, #tpu.memory_space<vmem>>, %arg3: memref<4x128xf32, #tpu.memory_space<vmem>>, %arg4: memref<128x128xf32, #tpu.memory_space<vmem>>, %arg5: memref<1x128xf32, #tpu.memory_space<vmem>>, %arg6: memref<128x8xf32, #tpu.memory_space<vmem>>, %arg7: memref<1x8xf32, #tpu.memory_space<vmem>>, %arg8: memref<4x8x8xf32, #tpu.memory_space<vmem>>, %arg9: memref<8x128xf32, #tpu.memory_space<vmem>>, %arg10: memref<8x128xf32, #tpu.memory_space<vmem>>, %arg11: memref<4x8x128xf32, #tpu.memory_space<vmem>>) attributes {dimension_semantics = [#tpu.dimension_semantics<arbitrary>], iteration_bounds = array<i64: 2>, scalar_prefetch = 0 : i64, scratch_operands = 2 : i64, tpu.core_type = #tpu.core_type<tc>, window_params = [{transform_indices = @transform_0, window_bounds = array<i64: 4, 8, 4>}, {pipeline_mode = #tpu.pipeline_mode<synchronous>, transform_indices = @transform_1, window_bounds = array<i64: 8, 128>}, {pipeline_mode = #tpu.pipeline_mode<synchronous>, transform_indices = @transform_2, window_bounds = array<i64: 4, 128>}, {pipeline_mode = #tpu.pipeline_mode<synchronous>, transform_indices = @transform_3, window_bounds = array<i64: 128, 128>}, {pipeline_mode = #tpu.pipeline_mode<synchronous>, transform_indices = @transform_4, window_bounds = array<i64: 1, 128>}, {pipeline_mode = #tpu.pipeline_mode<synchronous>, transform_indices = @transform_5, window_bounds = array<i64: 128, 8>}, {pipeline_mode = #tpu.pipeline_mode<synchronous>, transform_indices = @transform_6, window_bounds = array<i64: 1, 8>}, {transform_indices = @transform_7, window_bounds = array<i64: 4, 8, 8>}, {pipeline_mode = #tpu.pipeline_mode<synchronous>, transform_indices = @transform_8, window_bounds = array<i64: 8, 128>}]} {
    %c0_i32 = arith.constant 0 : i32
    %0 = arith.cmpi eq, %arg0, %c0_i32 : i32
    %1 = arith.extui %0 : i1 to i32
    %c0_i32_0 = arith.constant 0 : i32
    %2 = arith.cmpi ne, %1, %c0_i32_0 : i32
    scf.if %2 {
      %c0_56 = arith.constant 0 : index
      %c0_57 = arith.constant 0 : index
      %68 = vector.load %arg2[%c0_56, %c0_57] : memref<8x128xf32, #tpu.memory_space<vmem>>, vector<8x128xf32>
      %c0_58 = arith.constant 0 : index
      %c0_59 = arith.constant 0 : index
      %69 = vector.load %arg10[%c0_58, %c0_59] : memref<8x128xf32, #tpu.memory_space<vmem>>, vector<8x128xf32>
      tpu.vector_store %arg10[%c0_58, %c0_59], %68 {strides = array<i32>} : memref<8x128xf32, #tpu.memory_space<vmem>>, vector<8x128xf32>,
    } else {
    }
    %c0 = arith.constant 0 : index
    %c0_1 = arith.constant 0 : index
    %c0_2 = arith.constant 0 : index
    %3 = vector.load %arg1[%c0, %c0_1, %c0_2] : memref<4x8x4xf32, #tpu.memory_space<vmem>>, vector<4x8x4xf32>
    %4 = vector.shape_cast %3 : vector<4x8x4xf32> to vector<32x4xf32>
    %c0_3 = arith.constant 0 : index
    %c0_4 = arith.constant 0 : index
    %5 = vector.load %arg3[%c0_3, %c0_4] : memref<4x128xf32, #tpu.memory_space<vmem>>, vector<4x128xf32>
    %cst = arith.constant dense<0.000000e+00> : vector<32x128xf32>
    %6 = tpu.matmul %4, %5, %cst {dimension_numbers = #tpu.dot_dimension_numbers<[1], [0], [0], [1], [0, 0, 1, 1], [], []>} : vector<32x4xf32>, vector<4x128xf32>, vector<32x128xf32> -> vector<32x128xf32>
    %c0_5 = arith.constant 0 : index
    %c0_6 = arith.constant 0 : index
    %7 = vector.load %arg5[%c0_5, %c0_6] : memref<1x128xf32, #tpu.memory_space<vmem>>, vector<1x128xf32>
    %8 = vector.broadcast %7 : vector<1x128xf32> to vector<32x128xf32>
    %9 = arith.addf %6, %8 : vector<32x128xf32>
    %10 = vector.shape_cast %9 : vector<32x128xf32> to vector<4x8x128xf32>
    %c0_7 = arith.constant 0 : index
    %c0_8 = arith.constant 0 : index
    %c0_9 = arith.constant 0 : index
    %11 = vector.load %arg11[%c0_7, %c0_8, %c0_9] : memref<4x8x128xf32, #tpu.memory_space<vmem>>, vector<4x8x128xf32>
    tpu.vector_store %arg11[%c0_7, %c0_8, %c0_9], %10 {strides = array<i32>} : memref<4x8x128xf32, #tpu.memory_space<vmem>>, vector<4x8x128xf32>,
    %c0_10 = arith.constant 0 : index
    %c0_11 = arith.constant 0 : index
    %12 = vector.load %arg10[%c0_10, %c0_11] : memref<8x128xf32, #tpu.memory_space<vmem>>, vector<8x128xf32>
    %c0_i32_12 = arith.constant 0 : i32
    %13 = arith.index_cast %c0_i32_12 : i32 to index
    %c0_13 = arith.constant 0 : index
    %c0_14 = arith.constant 0 : index
    %14 = vector.load %arg11[%13, %c0_13, %c0_14] : memref<4x8x128xf32, #tpu.memory_space<vmem>>, vector<1x8x128xf32>
    %15 = vector.shape_cast %14 : vector<1x8x128xf32> to vector<8x128xf32>
    %c0_15 = arith.constant 0 : index
    %c0_16 = arith.constant 0 : index
    %16 = vector.load %arg4[%c0_15, %c0_16] : memref<128x128xf32, #tpu.memory_space<vmem>>, vector<128x128xf32>
    %cst_17 = arith.constant dense<0.000000e+00> : vector<8x128xf32>
    %17 = tpu.matmul %12, %16, %cst_17 {dimension_numbers = #tpu.dot_dimension_numbers<[1], [0], [0], [1], [0, 0, 1, 1], [], []>} : vector<8x128xf32>, vector<128x128xf32>, vector<8x128xf32> -> vector<8x128xf32>
    %18 = arith.addf %15, %17 : vector<8x128xf32>
    %19 = math.tanh %18 : vector<8x128xf32>
    %20 = arith.index_cast %c0_i32_12 : i32 to index
    %c0_18 = arith.constant 0 : index
    %c0_19 = arith.constant 0 : index
    %21 = vector.load %arg11[%20, %c0_18, %c0_19] : memref<4x8x128xf32, #tpu.memory_space<vmem>>, vector<1x8x128xf32>
    %22 = vector.shape_cast %21 : vector<1x8x128xf32> to vector<8x128xf32>
    %23 = vector.shape_cast %19 : vector<8x128xf32> to vector<1x8x128xf32>
    tpu.vector_store %arg11[%20, %c0_18, %c0_19], %23 {strides = array<i32>} : memref<4x8x128xf32, #tpu.memory_space<vmem>>, vector<1x8x128xf32>,
    %c1_i32 = arith.constant 1 : i32
    %24 = arith.index_cast %c1_i32 : i32 to index
    %c0_20 = arith.constant 0 : index
    %c0_21 = arith.constant 0 : index
    %25 = vector.load %arg11[%24, %c0_20, %c0_21] : memref<4x8x128xf32, #tpu.memory_space<vmem>>, vector<1x8x128xf32>
    %26 = vector.shape_cast %25 : vector<1x8x128xf32> to vector<8x128xf32>
    %c0_22 = arith.constant 0 : index
    %c0_23 = arith.constant 0 : index
    %27 = vector.load %arg4[%c0_22, %c0_23] : memref<128x128xf32, #tpu.memory_space<vmem>>, vector<128x128xf32>
    %cst_24 = arith.constant dense<0.000000e+00> : vector<8x128xf32>
    %28 = tpu.matmul %19, %27, %cst_24 {dimension_numbers = #tpu.dot_dimension_numbers<[1], [0], [0], [1], [0, 0, 1, 1], [], []>} : vector<8x128xf32>, vector<128x128xf32>, vector<8x128xf32> -> vector<8x128xf32>
    %29 = arith.addf %26, %28 : vector<8x128xf32>
    %30 = math.tanh %29 : vector<8x128xf32>
    %31 = arith.index_cast %c1_i32 : i32 to index
    %c0_25 = arith.constant 0 : index
    %c0_26 = arith.constant 0 : index
    %32 = vector.load %arg11[%31, %c0_25, %c0_26] : memref<4x8x128xf32, #tpu.memory_space<vmem>>, vector<1x8x128xf32>
    %33 = vector.shape_cast %32 : vector<1x8x128xf32> to vector<8x128xf32>
    %34 = vector.shape_cast %30 : vector<8x128xf32> to vector<1x8x128xf32>
    tpu.vector_store %arg11[%31, %c0_25, %c0_26], %34 {strides = array<i32>} : memref<4x8x128xf32, #tpu.memory_space<vmem>>, vector<1x8x128xf32>,
    %c2_i32 = arith.constant 2 : i32
    %35 = arith.index_cast %c2_i32 : i32 to index
    %c0_27 = arith.constant 0 : index
    %c0_28 = arith.constant 0 : index
    %36 = vector.load %arg11[%35, %c0_27, %c0_28] : memref<4x8x128xf32, #tpu.memory_space<vmem>>, vector<1x8x128xf32>
    %37 = vector.shape_cast %36 : vector<1x8x128xf32> to vector<8x128xf32>
    %c0_29 = arith.constant 0 : index
    %c0_30 = arith.constant 0 : index
    %38 = vector.load %arg4[%c0_29, %c0_30] : memref<128x128xf32, #tpu.memory_space<vmem>>, vector<128x128xf32>
    %cst_31 = arith.constant dense<0.000000e+00> : vector<8x128xf32>
    %39 = tpu.matmul %30, %38, %cst_31 {dimension_numbers = #tpu.dot_dimension_numbers<[1], [0], [0], [1], [0, 0, 1, 1], [], []>} : vector<8x128xf32>, vector<128x128xf32>, vector<8x128xf32> -> vector<8x128xf32>
    %40 = arith.addf %37, %39 : vector<8x128xf32>
    %41 = math.tanh %40 : vector<8x128xf32>
    %42 = arith.index_cast %c2_i32 : i32 to index
    %c0_32 = arith.constant 0 : index
    %c0_33 = arith.constant 0 : index
    %43 = vector.load %arg11[%42, %c0_32, %c0_33] : memref<4x8x128xf32, #tpu.memory_space<vmem>>, vector<1x8x128xf32>
    %44 = vector.shape_cast %43 : vector<1x8x128xf32> to vector<8x128xf32>
    %45 = vector.shape_cast %41 : vector<8x128xf32> to vector<1x8x128xf32>
    tpu.vector_store %arg11[%42, %c0_32, %c0_33], %45 {strides = array<i32>} : memref<4x8x128xf32, #tpu.memory_space<vmem>>, vector<1x8x128xf32>,
    %c3_i32 = arith.constant 3 : i32
    %46 = arith.index_cast %c3_i32 : i32 to index
    %c0_34 = arith.constant 0 : index
    %c0_35 = arith.constant 0 : index
    %47 = vector.load %arg11[%46, %c0_34, %c0_35] : memref<4x8x128xf32, #tpu.memory_space<vmem>>, vector<1x8x128xf32>
    %48 = vector.shape_cast %47 : vector<1x8x128xf32> to vector<8x128xf32>
    %c0_36 = arith.constant 0 : index
    %c0_37 = arith.constant 0 : index
    %49 = vector.load %arg4[%c0_36, %c0_37] : memref<128x128xf32, #tpu.memory_space<vmem>>, vector<128x128xf32>
    %cst_38 = arith.constant dense<0.000000e+00> : vector<8x128xf32>
    %50 = tpu.matmul %41, %49, %cst_38 {dimension_numbers = #tpu.dot_dimension_numbers<[1], [0], [0], [1], [0, 0, 1, 1], [], []>} : vector<8x128xf32>, vector<128x128xf32>, vector<8x128xf32> -> vector<8x128xf32>
    %51 = arith.addf %48, %50 : vector<8x128xf32>
    %52 = math.tanh %51 : vector<8x128xf32>
    %53 = arith.index_cast %c3_i32 : i32 to index
    %c0_39 = arith.constant 0 : index
    %c0_40 = arith.constant 0 : index
    %54 = vector.load %arg11[%53, %c0_39, %c0_40] : memref<4x8x128xf32, #tpu.memory_space<vmem>>, vector<1x8x128xf32>
    %55 = vector.shape_cast %54 : vector<1x8x128xf32> to vector<8x128xf32>
    %56 = vector.shape_cast %52 : vector<8x128xf32> to vector<1x8x128xf32>
    tpu.vector_store %arg11[%53, %c0_39, %c0_40], %56 {strides = array<i32>} : memref<4x8x128xf32, #tpu.memory_space<vmem>>, vector<1x8x128xf32>,
    %c4_i32 = arith.constant 4 : i32
    %c0_41 = arith.constant 0 : index
    %c0_42 = arith.constant 0 : index
    %57 = vector.load %arg10[%c0_41, %c0_42] : memref<8x128xf32, #tpu.memory_space<vmem>>, vector<8x128xf32>
    tpu.vector_store %arg10[%c0_41, %c0_42], %52 {strides = array<i32>} : memref<8x128xf32, #tpu.memory_space<vmem>>, vector<8x128xf32>,
    %c0_43 = arith.constant 0 : index
    %c0_44 = arith.constant 0 : index
    %58 = vector.load %arg9[%c0_43, %c0_44] : memref<8x128xf32, #tpu.memory_space<vmem>>, vector<8x128xf32>
    tpu.vector_store %arg9[%c0_43, %c0_44], %52 {strides = array<i32>} : memref<8x128xf32, #tpu.memory_space<vmem>>, vector<8x128xf32>,
    %c0_45 = arith.constant 0 : index
    %c0_46 = arith.constant 0 : index
    %c0_47 = arith.constant 0 : index
    %59 = vector.load %arg11[%c0_45, %c0_46, %c0_47] : memref<4x8x128xf32, #tpu.memory_space<vmem>>, vector<4x8x128xf32>
    %60 = vector.shape_cast %59 : vector<4x8x128xf32> to vector<32x128xf32>
    %c0_48 = arith.constant 0 : index
    %c0_49 = arith.constant 0 : index
    %61 = vector.load %arg6[%c0_48, %c0_49] : memref<128x8xf32, #tpu.memory_space<vmem>>, vector<128x8xf32>
    %cst_50 = arith.constant dense<0.000000e+00> : vector<32x8xf32>
    %62 = tpu.matmul %60, %61, %cst_50 {dimension_numbers = #tpu.dot_dimension_numbers<[1], [0], [0], [1], [0, 0, 1, 1], [], []>} : vector<32x128xf32>, vector<128x8xf32>, vector<32x8xf32> -> vector<32x8xf32>
    %c0_51 = arith.constant 0 : index
    %c0_52 = arith.constant 0 : index
    %63 = vector.load %arg7[%c0_51, %c0_52] : memref<1x8xf32, #tpu.memory_space<vmem>>, vector<1x8xf32>
    %64 = vector.broadcast %63 : vector<1x8xf32> to vector<32x8xf32>
    %65 = arith.addf %62, %64 : vector<32x8xf32>
    %66 = vector.shape_cast %65 : vector<32x8xf32> to vector<4x8x8xf32>
    %c0_53 = arith.constant 0 : index
    %c0_54 = arith.constant 0 : index
    %c0_55 = arith.constant 0 : index
    %67 = vector.load %arg8[%c0_53, %c0_54, %c0_55] : memref<4x8x8xf32, #tpu.memory_space<vmem>>, vector<4x8x8xf32>
    tpu.vector_store %arg8[%c0_53, %c0_54, %c0_55], %66 {strides = array<i32>} : memref<4x8x8xf32, #tpu.memory_space<vmem>>, vector<4x8x8xf32>,
    return
  }
  func.func @transform_0(%arg0: i32) -> (i32, i32, i32) {
    %c0_i32 = arith.constant 0 : i32
    %c0_i32_0 = arith.constant 0 : i32
    %c0_i32_1 = arith.constant 0 : i32
    return %arg0, %c0_i32, %c0_i32_0 : i32, i32, i32
  }
  func.func @transform_1(%arg0: i32) -> (i32, i32) {
    %c0_i32 = arith.constant 0 : i32
    %c0_i32_0 = arith.constant 0 : i32
    %c0_i32_1 = arith.constant 0 : i32
    return %c0_i32, %c0_i32_0 : i32, i32
  }
  func.func @transform_2(%arg0: i32) -> (i32, i32) {
    %c0_i32 = arith.constant 0 : i32
    %c0_i32_0 = arith.constant 0 : i32
    %c0_i32_1 = arith.constant 0 : i32
    return %c0_i32, %c0_i32_0 : i32, i32
  }
  func.func @transform_3(%arg0: i32) -> (i32, i32) {
    %c0_i32 = arith.constant 0 : i32
    %c0_i32_0 = arith.constant 0 : i32
    %c0_i32_1 = arith.constant 0 : i32
    return %c0_i32, %c0_i32_0 : i32, i32
  }
  func.func @transform_4(%arg0: i32) -> (i32, i32) {
    %c0_i32 = arith.constant 0 : i32
    %c0_i32_0 = arith.constant 0 : i32
    %c0_i32_1 = arith.constant 0 : i32
    return %c0_i32, %c0_i32_0 : i32, i32
  }
  func.func @transform_5(%arg0: i32) -> (i32, i32) {
    %c0_i32 = arith.constant 0 : i32
    %c0_i32_0 = arith.constant 0 : i32
    %c0_i32_1 = arith.constant 0 : i32
    return %c0_i32, %c0_i32_0 : i32, i32
  }
  func.func @transform_6(%arg0: i32) -> (i32, i32) {
    %c0_i32 = arith.constant 0 : i32
    %c0_i32_0 = arith.constant 0 : i32
    %c0_i32_1 = arith.constant 0 : i32
    return %c0_i32, %c0_i32_0 : i32, i32
  }
  func.func @transform_7(%arg0: i32) -> (i32, i32, i32) {
    %c0_i32 = arith.constant 0 : i32
    %c0_i32_0 = arith.constant 0 : i32
    %c0_i32_1 = arith.constant 0 : i32
    return %arg0, %c0_i32, %c0_i32_0 : i32, i32, i32
  }
  func.func @transform_8(%arg0: i32) -> (i32, i32) {
    %c0_i32 = arith.constant 0 : i32
    %c0_i32_0 = arith.constant 0 : i32
    %c0_i32_1 = arith.constant 0 : i32
    return %c0_i32, %c0_i32_0 : i32, i32
  }
}

</mosaic_0001>

<llo_original>
// kernel: tpu_custom_call.1
$region0: #{tpu_custom_call.1}
  #allocation0 [shape = 'u32[]', space=smem, size = 0x4, offset = 0x4, fixed_abs, tag = 'smem constant byte address 0x4 - core index']
  #allocation1 [shape = 'u32[144,128]{1,0:T(1,128)}', space=vmem, size = 0x12000, scoped, tag = 'internal scratch']
  #allocation2 [shape = 'f32[8,128]{1,0:T(8,128)}', space=vmem, size = 0x1000, scoped, tag = 'scratch operand']
  #allocation3 [shape = 'f32[4,8,128]{2,1,0:T(8,128)}', space=vmem, size = 0x4000, scoped, tag = 'scratch operand']
  %s0 = inlined_call_operand.hbm [shape: f32[8,8,4], index: 0, kind: input, shape index: {}]
  %s1 = inlined_call_operand.hbm [shape: f32[8,128], index: 1, kind: input, shape index: {}]
  %s2 = inlined_call_operand.hbm [shape: f32[4,128], index: 2, kind: input, shape index: {}]
  %s3 = inlined_call_operand.hbm [shape: f32[128,128], index: 3, kind: input, shape index: {}]
  %s4 = inlined_call_operand.hbm [shape: f32[1,128], index: 4, kind: input, shape index: {}]
  %s5 = inlined_call_operand.hbm [shape: f32[128,8], index: 5, kind: input, shape index: {}]
  %s6 = inlined_call_operand.hbm [shape: f32[1,8], index: 6, kind: input, shape index: {}]
  %s7 = inlined_call_operand.hbm [shape: f32[8,8,8], index: 7, kind: output, shape index: {0}]
  %s8 = inlined_call_operand.hbm [shape: f32[8,128], index: 8, kind: output, shape index: {1}]
  %9 = xla_tuple %s7, %s8
  %s10 = sld [smem:[#allocation0]]
  $region101: #{tpu_custom_call.1} parent=0
    _
  %s12 = ssub.s32 1, %s10
  %s13 = scalar_select 0, %s12, %s10
  $region1: #{tpu_custom_call.1} parent=0
    #allocation4 [shape = 'u8[32768]{0}', space=vmem, size = 0x8000, scoped, tag = 'input window, operand 0']
    #allocation5 [shape = 's32[2]{0}', space=sflag, size = 0x8, scoped, tag = 'scoped memory for tpu_custom_call.1']
    #allocation6 [shape = 's32[2]{0}', space=sflag, size = 0x8, scoped, tag = 'scoped memory for tpu_custom_call.1']
    #allocation7 [shape = 'u8[4096]{0}', space=vmem, size = 0x1000, scoped, tag = 'input window, operand 1, single buffered']
    #allocation8 [shape = 's32[1]{0}', space=sflag, size = 0x4, scoped, tag = 'scoped memory for tpu_custom_call.1']
    #allocation9 [shape = 'u8[2048]{0}', space=vmem, size = 0x800, scoped, tag = 'input window, operand 2, single buffered']
    #allocation10 [shape = 'u8[65536]{0}', space=vmem, size = 0x10000, scoped, tag = 'input window, operand 3, single buffered']
    #allocation11 [shape = 's32[1]{0}', space=sflag, size = 0x4, scoped, tag = 'scoped memory for tpu_custom_call.1']
    #allocation12 [shape = 'u8[512]{0}', space=vmem, size = 0x400, scoped, tag = 'input window, operand 4, single buffered']
    #allocation13 [shape = 'u8[65536]{0}', space=vmem, size = 0x10000, scoped, tag = 'input window, operand 5, single buffered']
    #allocation14 [shape = 's32[1]{0}', space=sflag, size = 0x4, scoped, tag = 'scoped memory for tpu_custom_call.1']
    #allocation15 [shape = 'u8[512]{0}', space=vmem, size = 0x400, scoped, tag = 'input window, operand 6, single buffered']
    #allocation16 [shape = 'u8[32768]{0}', space=vmem, size = 0x8000, scoped, tag = 'output window, operand 0']
    #allocation17 [shape = 'u8[4096]{0}', space=vmem, size = 0x1000, scoped, tag = 'output window, operand 1, single buffered']
    #allocation18 [shape = 's32[1]{0}', space=sflag, size = 0x4, scoped, tag = 'scoped memory for tpu_custom_call.1']
    %14 = vsyncpa [#allocation5], 0
    %s15 = scalar_lea.sflag [#allocation5], 1
    %16 = vsyncpa %s15, 0
    %17 = vsyncpa [#allocation8], 0
    %18 = vsyncpa [#allocation11], 0
    %19 = vsyncpa [#allocation14], 0
    %20 = vsyncpa [#allocation6], 0
    %s21 = scalar_lea.sflag [#allocation6], 1
    %22 = vsyncpa %s21, 0
    %23 = vsyncpa [#allocation18], 0
    loop: start=0, step=1, limit=4
    $region2: #{tpu_custom_call.1} parent=1 // loop_pre_header
      _
    $region3: #{tpu_custom_call.1} parent=1 // loop_header
      %s25 = sphi 0, %s29
      %p26 = scmp.ge.s32.totalorder %s25, 4
      %s35 = sphi 0, %s37
      %s38 = sphi 0, %s35
      %s39 = sphi 0, %s38
      %s55 = sphi 0, %s39
      %s59 = sphi 0, %s59
      %s61 = sphi 0, %s59
      %s62 = sphi 0, %s61
      %s76 = sphi 0, %s62
      %s80 = sphi 0, %s80
      %s82 = sphi 0, %s80
      %s83 = sphi 0, %s82
      %s97 = sphi 0, %s83
      %s101 = sphi 0, %s101
      %s103 = sphi 0, %s101
      %s104 = sphi 0, %s103
      %s118 = sphi 0, %s104
      %s122 = sphi 0, %s122
      %s124 = sphi 0, %s122
      %s125 = sphi 0, %s124
      %s139 = sphi 0, %s125
      %s143 = sphi 0, %s143
      %s145 = sphi 0, %s143
      %s146 = sphi 0, %s145
      %s160 = sphi 0, %s146
      %s164 = sphi 0, %s164
      %s166 = sphi 0, %s164
      %s167 = sphi 0, %s166
      %s181 = sphi 0, %s167
      %s187 = sphi 0, %s189
      %s190 = sphi 0, %s187
      %s191 = sphi 0, %s190
      %s207 = sphi 0, %s191
      %s211 = sphi 0, %s211
      %s213 = sphi 0, %s211
      %s214 = sphi 0, %s213
      %s228 = sphi 0, %s214
    $region4: #{tpu_custom_call.1} parent=1 // loop_header_branch
      %28 = sbr.rel (%p26) target = $region8
    $region5: #{tpu_custom_call.1} parent=1 // loop_body
      %s30 = ssub.s32 %s25, 1
      %s31 = ssub.s32 %s25, 2
      %s32 = sadd.s32 %s25, 1
      %s33 = ssub.s32 %s25, %s32
      %p34 = scmp.eq.s32.totalorder %s33, 0
      %s36 = sadd.s32 %s35, 1
      %s37 = scalar_select %p34, %s35, %s36
      %p40 = pneg %p34
      %p41 = scmp.eq.s32.totalorder %s25, 1
      %p42 = por %p40, %p41
      %p43 = scmp.ne.s32.totalorder %s35, %s38
      %p44 = scmp.eq.s32.totalorder %s25, 0
      %p45 = por %p43, %p44
      %p46 = scmp.ne.s32.totalorder %s35, %s38
      %p47 = scmp.eq.s32.totalorder %s30, 1
      %p48 = por %p46, %p47
      %p49 = scmp.ne.s32.totalorder %s38, %s39
      %p50 = scmp.eq.s32.totalorder %s30, 0
      %p51 = por %p49, %p50
      %p52 = scmp.ne.s32.totalorder %s38, %s39
      %p53 = scmp.eq.s32.totalorder %s31, 1
      %p54 = por %p52, %p53
      %p56 = scmp.ne.s32.totalorder %s39, %s55
      %p57 = scmp.eq.s32.totalorder %s31, 0
      %p58 = por %p56, %p57
      %s60 = sadd.s32 %s59, 1
      %p63 = scmp.eq.s32.totalorder %s25, 1
      %p64 = scmp.ne.s32.totalorder %s59, %s61
      %p65 = scmp.eq.s32.totalorder %s25, 0
      %p66 = por %p64, %p65
      %p67 = scmp.ne.s32.totalorder %s59, %s61
      %p68 = scmp.eq.s32.totalorder %s30, 1
      %p69 = por %p67, %p68
      %p70 = scmp.ne.s32.totalorder %s61, %s62
      %p71 = scmp.eq.s32.totalorder %s30, 0
      %p72 = por %p70, %p71
      %p73 = scmp.ne.s32.totalorder %s61, %s62
      %p74 = scmp.eq.s32.totalorder %s31, 1
      %p75 = por %p73, %p74
      %p77 = scmp.ne.s32.totalorder %s62, %s76
      %p78 = scmp.eq.s32.totalorder %s31, 0
      %p79 = por %p77, %p78
      %s81 = sadd.s32 %s80, 1
      %p84 = scmp.eq.s32.totalorder %s25, 1
      %p85 = scmp.ne.s32.totalorder %s80, %s82
      %p86 = scmp.eq.s32.totalorder %s25, 0
      %p87 = por %p85, %p86
      %p88 = scmp.ne.s32.totalorder %s80, %s82
      %p89 = scmp.eq.s32.totalorder %s30, 1
      %p90 = por %p88, %p89
      %p91 = scmp.ne.s32.totalorder %s82, %s83
      %p92 = scmp.eq.s32.totalorder %s30, 0
      %p93 = por %p91, %p92
      %p94 = scmp.ne.s32.totalorder %s82, %s83
      %p95 = scmp.eq.s32.totalorder %s31, 1
      %p96 = por %p94, %p95
      %p98 = scmp.ne.s32.totalorder %s83, %s97
      %p99 = scmp.eq.s32.totalorder %s31, 0
      %p100 = por %p98, %p99
      %s102 = sadd.s32 %s101, 1
      %p105 = scmp.eq.s32.totalorder %s25, 1
      %p106 = scmp.ne.s32.totalorder %s101, %s103
      %p107 = scmp.eq.s32.totalorder %s25, 0
      %p108 = por %p106, %p107
      %p109 = scmp.ne.s32.totalorder %s101, %s103
      %p110 = scmp.eq.s32.totalorder %s30, 1
      %p111 = por %p109, %p110
      %p112 = scmp.ne.s32.totalorder %s103, %s104
      %p113 = scmp.eq.s32.totalorder %s30, 0
      %p114 = por %p112, %p113
      %p115 = scmp.ne.s32.totalorder %s103, %s104
      %p116 = scmp.eq.s32.totalorder %s31, 1
      %p117 = por %p115, %p116
      %p119 = scmp.ne.s32.totalorder %s104, %s118
      %p120 = scmp.eq.s32.totalorder %s31, 0
      %p121 = por %p119, %p120
      %s123 = sadd.s32 %s122, 1
      %p126 = scmp.eq.s32.totalorder %s25, 1
      %p127 = scmp.ne.s32.totalorder %s122, %s124
      %p128 = scmp.eq.s32.totalorder %s25, 0
      %p129 = por %p127, %p128
      %p130 = scmp.ne.s32.totalorder %s122, %s124
      %p131 = scmp.eq.s32.totalorder %s30, 1
      %p132 = por %p130, %p131
      %p133 = scmp.ne.s32.totalorder %s124, %s125
      %p134 = scmp.eq.s32.totalorder %s30, 0
      %p135 = por %p133, %p134
      %p136 = scmp.ne.s32.totalorder %s124, %s125
      %p137 = scmp.eq.s32.totalorder %s31, 1
      %p138 = por %p136, %p137
      %p140 = scmp.ne.s32.totalorder %s125, %s139
      %p141 = scmp.eq.s32.totalorder %s31, 0
      %p142 = por %p140, %p141
      %s144 = sadd.s32 %s143, 1
      %p147 = scmp.eq.s32.totalorder %s25, 1
      %p148 = scmp.ne.s32.totalorder %s143, %s145
      %p149 = scmp.eq.s32.totalorder %s25, 0
      %p150 = por %p148, %p149
      %p151 = scmp.ne.s32.totalorder %s143, %s145
      %p152 = scmp.eq.s32.totalorder %s30, 1
      %p153 = por %p151, %p152
      %p154 = scmp.ne.s32.totalorder %s145, %s146
      %p155 = scmp.eq.s32.totalorder %s30, 0
      %p156 = por %p154, %p155
      %p157 = scmp.ne.s32.totalorder %s145, %s146
      %p158 = scmp.eq.s32.totalorder %s31, 1
      %p159 = por %p157, %p158
      %p161 = scmp.ne.s32.totalorder %s146, %s160
      %p162 = scmp.eq.s32.totalorder %s31, 0
      %p163 = por %p161, %p162
      %s165 = sadd.s32 %s164, 1
      %p168 = scmp.eq.s32.totalorder %s25, 1
      %p169 = scmp.ne.s32.totalorder %s164, %s166
      %p170 = scmp.eq.s32.totalorder %s25, 0
      %p171 = por %p169, %p170
      %p172 = scmp.ne.s32.totalorder %s164, %s166
      %p173 = scmp.eq.s32.totalorder %s30, 1
      %p174 = por %p172, %p173
      %p175 = scmp.ne.s32.totalorder %s166, %s167
      %p176 = scmp.eq.s32.totalorder %s30, 0
      %p177 = por %p175, %p176
      %p178 = scmp.ne.s32.totalorder %s166, %s167
      %p179 = scmp.eq.s32.totalorder %s31, 1
      %p180 = por %p178, %p179
      %p182 = scmp.ne.s32.totalorder %s167, %s181
      %p183 = scmp.eq.s32.totalorder %s31, 0
      %p184 = por %p182, %p183
      %s185 = ssub.s32 %s25, %s32
      %p186 = scmp.eq.s32.totalorder %s185, 0
      %s188 = sadd.s32 %s187, 1
      %s189 = scalar_select %p186, %s187, %s188
      %p192 = pneg %p186
      %p193 = scmp.eq.s32.totalorder %s25, 1
      %p194 = por %p192, %p193
      %p195 = scmp.ne.s32.totalorder %s187, %s190
      %p196 = scmp.eq.s32.totalorder %s25, 0
      %p197 = por %p195, %p196
      %p198 = scmp.ne.s32.totalorder %s187, %s190
      %p199 = scmp.eq.s32.totalorder %s30, 1
      %p200 = por %p198, %p199
      %p201 = scmp.ne.s32.totalorder %s190, %s191
      %p202 = scmp.eq.s32.totalorder %s30, 0
      %p203 = por %p201, %p202
      %p204 = scmp.ne.s32.totalorder %s190, %s191
      %p205 = scmp.eq.s32.totalorder %s31, 1
      %p206 = por %p204, %p205
      %p208 = scmp.ne.s32.totalorder %s191, %s207
      %p209 = scmp.eq.s32.totalorder %s31, 0
      %p210 = por %p208, %p209
      %s212 = sadd.s32 %s211, 1
      %p215 = scmp.eq.s32.totalorder %s25, 1
      %p216 = scmp.ne.s32.totalorder %s211, %s213
      %p217 = scmp.eq.s32.totalorder %s25, 0
      %p218 = por %p216, %p217
      %p219 = scmp.ne.s32.totalorder %s211, %s213
      %p220 = scmp.eq.s32.totalorder %s30, 1
      %p221 = por %p219, %p220
      %p222 = scmp.ne.s32.totalorder %s213, %s214
      %p223 = scmp.eq.s32.totalorder %s30, 0
      %p224 = por %p222, %p223
      %p225 = scmp.ne.s32.totalorder %s213, %s214
      %p226 = scmp.eq.s32.totalorder %s31, 1
      %p227 = por %p225, %p226
      %p229 = scmp.ne.s32.totalorder %s214, %s228
      %p230 = scmp.eq.s32.totalorder %s31, 0
      %p231 = por %p229, %p230
      %p232 = scmp.le.s32.totalorder 1, %s25
      %p233 = scmp.lt.s32.totalorder %s25, 3
      %p234 = pnand %p232, %p233
      %p235 = pneg %p234
      // Predicated region
      $region9: #{tpu_custom_call.1} parent=5 // pred_check
        _
      $region10: #{tpu_custom_call.1} parent=5 // pred_check_branch
        %237 = sbr.rel (%p234) target = $region12
      $region11: #{tpu_custom_call.1} parent=5 // pred_region
        %s238 = ssub.s32 %s25, 1
        // Predicated region
        $region13: #{tpu_custom_call.1} parent=11 // pred_check
          %p239 = pneg %p72
        $region14: #{tpu_custom_call.1} parent=11 // pred_check_branch
          %241 = sbr.rel (%p239) target = $region16
        $region15: #{tpu_custom_call.1} parent=11 // pred_region
          %s243 = ssub.s32 128, 128
          %244 = vsyncadd [#allocation8], %s243
          %s246 = sshll.u32 [#allocation7], 4
          %s247 = int_to_ptr.vmem [resolvable:$true] %s246
          %249 = dma.hbm_to_vmem [thread:$0]  %s1, 128, %s247, [#allocation8]
        $region16: #{tpu_custom_call.1} parent=11 // pred_fallthru
          _
        // Predicated region
        $region17: #{tpu_custom_call.1} parent=11 // pred_check
          %p250 = pneg %p93
        $region18: #{tpu_custom_call.1} parent=11 // pred_check_branch
          %252 = sbr.rel (%p250) target = $region20
        $region19: #{tpu_custom_call.1} parent=11 // pred_region
          %s254 = ssub.s32 64, 64
          %255 = vsyncadd [#allocation8], %s254
          %s257 = sshll.u32 [#allocation9], 4
          %s258 = int_to_ptr.vmem [resolvable:$true] %s257
          %260 = dma.hbm_to_vmem [thread:$0]  %s2, 64, %s258, [#allocation8]
        $region20: #{tpu_custom_call.1} parent=11 // pred_fallthru
          _
        // Predicated region
        $region21: #{tpu_custom_call.1} parent=11 // pred_check
          %p261 = pneg %p114
        $region22: #{tpu_custom_call.1} parent=11 // pred_check_branch
          %263 = sbr.rel (%p261) target = $region24
        $region23: #{tpu_custom_call.1} parent=11 // pred_region
          %s265 = ssub.s32 2048, 2048
          %266 = vsyncadd [#allocation11], %s265
          %s267 = sshll.u32 [#allocation10], 4
          %s268 = int_to_ptr.vmem [resolvable:$true] %s267
          %273 = dma.hbm_to_vmem [thread:$0]  %s3, 2048, %s268, [#allocation11], 128, 128, 8
        $region24: #{tpu_custom_call.1} parent=11 // pred_fallthru
          _
        // Predicated region
        $region25: #{tpu_custom_call.1} parent=11 // pred_check
          %p274 = pneg %p135
        $region26: #{tpu_custom_call.1} parent=11 // pred_check_branch
          %276 = sbr.rel (%p274) target = $region28
        $region27: #{tpu_custom_call.1} parent=11 // pred_region
          %s278 = ssub.s32 16, 16
          %279 = vsyncadd [#allocation11], %s278
          %s281 = sshll.u32 [#allocation12], 4
          %s282 = int_to_ptr.vmem [resolvable:$true] %s281
          %284 = dma.hbm_to_vmem [thread:$0]  %s4, 16, %s282, [#allocation11]
        $region28: #{tpu_custom_call.1} parent=11 // pred_fallthru
          _
        // Predicated region
        $region29: #{tpu_custom_call.1} parent=11 // pred_check
          %p285 = pneg %p156
        $region30: #{tpu_custom_call.1} parent=11 // pred_check_branch
          %287 = sbr.rel (%p285) target = $region32
        $region31: #{tpu_custom_call.1} parent=11 // pred_region
          %s289 = ssub.s32 2048, 2048
          %290 = vsyncadd [#allocation14], %s289
          %s291 = sshll.u32 [#allocation13], 4
          %s292 = int_to_ptr.vmem [resolvable:$true] %s291
          %297 = dma.hbm_to_vmem [thread:$0]  %s5, 2048, %s292, [#allocation14], 128, 128, 8
        $region32: #{tpu_custom_call.1} parent=11 // pred_fallthru
          _
        // Predicated region
        $region33: #{tpu_custom_call.1} parent=11 // pred_check
          %p298 = pneg %p177
        $region34: #{tpu_custom_call.1} parent=11 // pred_check_branch
          %300 = sbr.rel (%p298) target = $region36
        $region35: #{tpu_custom_call.1} parent=11 // pred_region
          %s302 = ssub.s32 16, 16
          %303 = vsyncadd [#allocation14], %s302
          %s305 = sshll.u32 [#allocation15], 4
          %s306 = int_to_ptr.vmem [resolvable:$true] %s305
          %308 = dma.hbm_to_vmem [thread:$0]  %s6, 16, %s306, [#allocation14]
        $region36: #{tpu_custom_call.1} parent=11 // pred_fallthru
          _
      $region12: #{tpu_custom_call.1} parent=5 // pred_fallthru
        _
      %p309 = scmp.lt.s32.totalorder %s25, 2
      // Predicated region
      $region37: #{tpu_custom_call.1} parent=5 // pred_check
        %p310 = pneg %p309
      $region38: #{tpu_custom_call.1} parent=5 // pred_check_branch
        %312 = sbr.rel (%p310) target = $region40
      $region39: #{tpu_custom_call.1} parent=5 // pred_region
        // Predicated region
        $region41: #{tpu_custom_call.1} parent=39 // pred_check
          %p313 = pneg %p45
        $region42: #{tpu_custom_call.1} parent=39 // pred_check_branch
          %315 = sbr.rel (%p313) target = $region44
        $region43: #{tpu_custom_call.1} parent=39 // pred_region
          %s316 = sand.u32 %s35, 1
          %s317 = scalar_lea.sflag [#allocation5], %s316
          %s318 = sand.u32 %s35, 1
          %s319 = smul.addr %s318, 32
          %s320 = scalar_lea.vmem [#allocation4], %s319
          %s321 = smul.u32 4, %s25
          %s323 = ssub.s32 512, 512
          %324 = vsyncadd %s317, %s323
          %s325 = smul.addr %s321, 128
          %s326 = scalar_lea.hbm %s0, %s325
          %s327 = sshll.u32 %s320, 4
          %s328 = int_to_ptr.vmem [resolvable:$true] %s327
          %333 = dma.hbm_to_vmem [thread:$0]  %s326, 512, %s328, %s317, 128, 128, 8
        $region44: #{tpu_custom_call.1} parent=39 // pred_fallthru
          _
      $region40: #{tpu_custom_call.1} parent=5 // pred_fallthru
        _
      %p334 = scmp.le.s32.totalorder 1, %s25
      %p335 = scmp.lt.s32.totalorder %s25, 3
      %p336 = pnand %p334, %p335
      %p337 = pneg %p336
      // Predicated region
      $region45: #{tpu_custom_call.1} parent=5 // pred_check
        _
      $region46: #{tpu_custom_call.1} parent=5 // pred_check_branch
        %339 = sbr.rel (%p336) target = $region48
      $region47: #{tpu_custom_call.1} parent=5 // pred_region
        %s340 = ssub.s32 %s25, 1
        %s341 = sand.u32 %s38, 1
        %s342 = scalar_lea.sflag [#allocation5], %s341
        %s343 = sand.u32 %s38, 1
        %s344 = smul.addr %s343, 32
        %s345 = scalar_lea.vmem [#allocation4], %s344
        // Predicated region
        $region49: #{tpu_custom_call.1} parent=47 // pred_check
          %p346 = pneg %p51
        $region50: #{tpu_custom_call.1} parent=47 // pred_check_branch
          %348 = sbr.rel (%p346) target = $region52
        $region51: #{tpu_custom_call.1} parent=47 // pred_region
          %349 = dma.done %s342, 512
        $region52: #{tpu_custom_call.1} parent=47 // pred_fallthru
          _
        // Predicated region
        $region53: #{tpu_custom_call.1} parent=47 // pred_check
          %p350 = pneg %p72
        $region54: #{tpu_custom_call.1} parent=47 // pred_check_branch
          %352 = sbr.rel (%p350) target = $region56
        $region55: #{tpu_custom_call.1} parent=47 // pred_region
          %353 = dma.done [#allocation8], 128
        $region56: #{tpu_custom_call.1} parent=47 // pred_fallthru
          _
        // Predicated region
        $region57: #{tpu_custom_call.1} parent=47 // pred_check
          %p354 = pneg %p93
        $region58: #{tpu_custom_call.1} parent=47 // pred_check_branch
          %356 = sbr.rel (%p354) target = $region60
        $region59: #{tpu_custom_call.1} parent=47 // pred_region
          %357 = dma.done [#allocation8], 64
        $region60: #{tpu_custom_call.1} parent=47 // pred_fallthru
          _
        // Predicated region
        $region61: #{tpu_custom_call.1} parent=47 // pred_check
          %p358 = pneg %p114
        $region62: #{tpu_custom_call.1} parent=47 // pred_check_branch
          %360 = sbr.rel (%p358) target = $region64
        $region63: #{tpu_custom_call.1} parent=47 // pred_region
          %361 = dma.done [#allocation11], 2048
        $region64: #{tpu_custom_call.1} parent=47 // pred_fallthru
          _
        // Predicated region
        $region65: #{tpu_custom_call.1} parent=47 // pred_check
          %p362 = pneg %p135
        $region66: #{tpu_custom_call.1} parent=47 // pred_check_branch
          %364 = sbr.rel (%p362) target = $region68
        $region67: #{tpu_custom_call.1} parent=47 // pred_region
          %365 = dma.done [#allocation11], 16
        $region68: #{tpu_custom_call.1} parent=47 // pred_fallthru
          _
        // Predicated region
        $region69: #{tpu_custom_call.1} parent=47 // pred_check
          %p366 = pneg %p156
        $region70: #{tpu_custom_call.1} parent=47 // pred_check_branch
          %368 = sbr.rel (%p366) target = $region72
        $region71: #{tpu_custom_call.1} parent=47 // pred_region
          %369 = dma.done [#allocation14], 2048
        $region72: #{tpu_custom_call.1} parent=47 // pred_fallthru
          _
        // Predicated region
        $region73: #{tpu_custom_call.1} parent=47 // pred_check
          %p370 = pneg %p177
        $region74: #{tpu_custom_call.1} parent=47 // pred_check_branch
          %372 = sbr.rel (%p370) target = $region76
        $region75: #{tpu_custom_call.1} parent=47 // pred_region
          %373 = dma.done [#allocation14], 16
        $region76: #{tpu_custom_call.1} parent=47 // pred_fallthru
          _
        %s374 = sand.u32 %s38, 1
        %s375 = scalar_lea.sflag [#allocation5], %s374
        %s376 = sand.u32 %s38, 1
        %s377 = smul.addr %s376, 32
        %s378 = scalar_lea.vmem [#allocation4], %s377
        %p379 = pneg %p51
        %p380 = pneg %p48
        %p381 = pneg %p72
        %p382 = pneg %p69
        %p383 = pneg %p93
        %p384 = pneg %p90
        %p385 = pneg %p114
        %p386 = pneg %p111
        %p387 = pneg %p135
        %p388 = pneg %p132
        %p389 = pneg %p156
        %p390 = pneg %p153
        %p391 = pneg %p177
        %p392 = pneg %p174
        %p393 = pneg %p203
        %p394 = pneg %p200
        %s395 = sand.u32 %s190, 1
        %s396 = scalar_lea.sflag [#allocation6], %s395
        %s397 = sand.u32 %s190, 1
        %s398 = smul.addr %s397, 32
        %s399 = scalar_lea.vmem [#allocation16], %s398
        %p400 = pneg %p224
        %p401 = pneg %p221
        %s402 = smul.u32 4, %s30
        %s403 = smul.u32 4, %s30
        %p404 = scmp.eq.s32.totalorder %s30, 0
        // Predicated region
        $region77: #{tpu_custom_call.1} parent=47 // pred_check
          %p405 = pneg %p404
        $region78: #{tpu_custom_call.1} parent=47 // pred_check_branch
          %407 = sbr.rel (%p405) target = $region80
        $region79: #{tpu_custom_call.1} parent=47 // pred_region
          %v408 = vld [vmem:[#allocation7] sm:$0xff]
          %409 = vst [vmem:[#allocation2] sm:$0xff] %v408
        $region80: #{tpu_custom_call.1} parent=47 // pred_fallthru
          _
        %v410 = vld [vmem:[%s345] sm:$0xff]
        %v411 = vld [vmem:[%s345 + $0x8] sm:$0xff]
        %v412 = vld [vmem:[%s345 + $0x10] sm:$0xff]
        %v413 = vld [vmem:[%s345 + $0x18] sm:$0xff]
        %v414 = vld [vmem:[#allocation9] sm:$0xf]
        %v415 = vld [vmem:[#allocation12] sm:$0x1]
        %v417 = vlaneseq
        %v418 = vshrl.u32 %v417, 7
        %v419 = vsub.s32 0, %v418
        %v420 = vrot.slane %v415, %v419
        %vm422 = vcmask 31744
        %v424 = vsel %vm422, %v410, 0
        %v427 = vsel %vm422, %v411, 0
        %v430 = vsel %vm422, %v412, 0
        %v433 = vsel %vm422, %v413, 0
        %vm435 = vcmask 1043456
        %v437 = vsel %vm435, %v414, 0
        %439 = vmatprep.subr.mxu0 0.0
        %440 = vmatpush1.msra.mxu0 %v437
        %441 = vmatprep.subr.mxu0 0.0
        %442 = vmatpush1.msra.mxu0 0.0
        %443 = vmatprep.subr.mxu0 0.0
        %444 = vmatpush1.msra.mxu0 0.0
        %445 = vmatprep.subr.mxu0 0.0
        %446 = vmatpush1.msra.mxu0 0.0
        %447 = vmatprep.subr.mxu0 0.0
        %448 = vmatpush1.msra.mxu0 0.0
        %449 = vmatprep.subr.mxu0 0.0
        %450 = vmatpush1.msra.mxu0 0.0
        %451 = vmatprep.subr.mxu0 0.0
        %452 = vmatpush1.msra.mxu0 0.0
        %453 = vmatprep.subr.mxu0 0.0
        %454 = vmatpush1.msra.mxu0 0.0
        %455 = vmatprep.subr.mxu0 0.0
        %456 = vmatpush1.msra.mxu0 0.0
        %457 = vmatprep.subr.mxu0 0.0
        %458 = vmatpush1.msra.mxu0 0.0
        %459 = vmatprep.subr.mxu0 0.0
        %460 = vmatpush1.msra.mxu0 0.0
        %461 = vmatprep.subr.mxu0 0.0
        %462 = vmatpush1.msra.mxu0 0.0
        %463 = vmatprep.subr.mxu0 0.0
        %464 = vmatpush1.msra.mxu0 0.0
        %465 = vmatprep.subr.mxu0 0.0
        %466 = vmatpush1.msra.mxu0 0.0
        %467 = vmatprep.subr.mxu0 0.0
        %468 = vmatpush1.msra.mxu0 0.0
        %469 = vmatprep.subr.mxu0 0.0
        %470 = vmatpush1.msra.mxu0 0.0
        %471 = vmatprep.subr.mxu0 0.0
        %472 = vmatpush1.msra.mxu0 0.0
        %473 = vmatprep.subr.mxu0 0.0
        %474 = vmatpush1.msra.mxu0 0.0
        %475 = vmatprep.subr.mxu0 0.0
        %476 = vmatpush1.msra.mxu0 0.0
        %477 = vmatprep.subr.mxu0 0.0
        %478 = vmatpush1.msra.mxu0 0.0
        %479 = vmatprep.subr.mxu0 0.0
        %480 = vmatpush1.msra.mxu0 0.0
        %481 = vmatprep.subr.mxu0 0.0
        %482 = vmatpush1.msra.mxu0 0.0
        %483 = vmatprep.subr.mxu0 0.0
        %484 = vmatpush1.msra.mxu0 0.0
        %485 = vmatprep.subr.mxu0 0.0
        %486 = vmatpush1.msra.mxu0 0.0
        %487 = vmatprep.subr.mxu0 0.0
        %488 = vmatpush1.msra.mxu0 0.0
        %489 = vmatprep.subr.mxu0 0.0
        %490 = vmatpush1.msra.mxu0 0.0
        %491 = vmatprep.subr.mxu0 0.0
        %492 = vmatpush1.msra.mxu0 0.0
        %493 = vmatprep.subr.mxu0 0.0
        %494 = vmatpush1.msra.mxu0 0.0
        %495 = vmatprep.subr.mxu0 0.0
        %496 = vmatpush1.msra.mxu0 0.0
        %497 = vmatprep.subr.mxu0 0.0
        %498 = vmatpush1.msra.mxu0 0.0
        %499 = vmatprep.subr.mxu0 0.0
        %500 = vmatpush1.msra.mxu0 0.0
        %501 = vmatprep.subr.mxu0 0.0
        %502 = vmatpush1.msra.mxu0 0.0
        %503 = vmatprep.mubr.f32.mxu0 0.0
        %504 = vmatmul.mubr.f32.gmra.mrb[0].mxu0 %v424
        %v505 = vpop.f32.mrb[0].mxu0
        %v506 = vadd.f32 %v420, %v505
        %v507 = vpop.f32.mrb[0].mxu0
        %508 = vmatprep.mubr.f32.mxu0 0.0
        %509 = vmatmul.mubr.f32.gmra.mrb[0].mxu0 %v427
        %v510 = vpop.f32.mrb[0].mxu0
        %v511 = vadd.f32 %v420, %v510
        %v512 = vpop.f32.mrb[0].mxu0
        %513 = vmatprep.mubr.f32.mxu0 0.0
        %514 = vmatmul.mubr.f32.gmra.mrb[0].mxu0 %v430
        %v515 = vpop.f32.mrb[0].mxu0
        %v516 = vadd.f32 %v420, %v515
        %v517 = vpop.f32.mrb[0].mxu0
        %518 = vmatprep.mubr.f32.mxu0 0.0
        %519 = vmatmul.mubr.f32.gmra.mrb[0].mxu0 %v433
        %v520 = vpop.f32.mrb[0].mxu0
        %v521 = vadd.f32 %v420, %v520
        %v522 = vpop.f32.mrb[0].mxu0
        %523 = vdwg.mxu0
        %524 = vst [vmem:[#allocation3] sm:$0xff] %v506
        %525 = vst [vmem:[#allocation3 + $0x8] sm:$0xff] %v511
        %526 = vst [vmem:[#allocation3 + $0x10] sm:$0xff] %v516
        %527 = vst [vmem:[#allocation3 + $0x18] sm:$0xff] %v521
        %v528 = vld [vmem:[#allocation2] sm:$0xff]
        %v529 = vld [vmem:[#allocation3] sm:$0xff]
        %v530 = vld [vmem:[#allocation10] sm:$0xff]
        %v531 = vld [vmem:[#allocation10 + $0x8] sm:$0xff]
        %v532 = vld [vmem:[#allocation10 + $0x10] sm:$0xff]
        %v533 = vld [vmem:[#allocation10 + $0x18] sm:$0xff]
        %v534 = vld [vmem:[#allocation10 + $0x20] sm:$0xff]
        %v535 = vld [vmem:[#allocation10 + $0x28] sm:$0xff]
        %v536 = vld [vmem:[#allocation10 + $0x30] sm:$0xff]
        %v537 = vld [vmem:[#allocation10 + $0x38] sm:$0xff]
        %v538 = vld [vmem:[#allocation10 + $0x40] sm:$0xff]
        %v539 = vld [vmem:[#allocation10 + $0x48] sm:$0xff]
        %v540 = vld [vmem:[#allocation10 + $0x50] sm:$0xff]
        %v541 = vld [vmem:[#allocation10 + $0x58] sm:$0xff]
        %v542 = vld [vmem:[#allocation10 + $0x60] sm:$0xff]
        %v543 = vld [vmem:[#allocation10 + $0x68] sm:$0xff]
        %v544 = vld [vmem:[#allocation10 + $0x70] sm:$0xff]
        %v545 = vld [vmem:[#allocation10 + $0x78] sm:$0xff]
        %546 = vmatprep.subr.mxu0 0.0
        %547 = vmatpush1.msra.mxu0 %v530
        %548 = vmatprep.subr.mxu0 0.0
        %549 = vmatpush1.msra.mxu0 %v531
        %550 = vmatprep.subr.mxu0 0.0
        %551 = vmatpush1.msra.mxu0 %v532
        %552 = vmatprep.subr.mxu0 0.0
        %553 = vmatpush1.msra.mxu0 %v533
        %554 = vmatprep.subr.mxu0 0.0
        %555 = vmatpush1.msra.mxu0 %v534
        %556 = vmatprep.subr.mxu0 0.0
        %557 = vmatpush1.msra.mxu0 %v535
        %558 = vmatprep.subr.mxu0 0.0
        %559 = vmatpush1.msra.mxu0 %v536
        %560 = vmatprep.subr.mxu0 0.0
        %561 = vmatpush1.msra.mxu0 %v537
        %562 = vmatprep.subr.mxu0 0.0
        %563 = vmatpush1.msra.mxu0 %v538
        %564 = vmatprep.subr.mxu0 0.0
        %565 = vmatpush1.msra.mxu0 %v539
        %566 = vmatprep.subr.mxu0 0.0
        %567 = vmatpush1.msra.mxu0 %v540
        %568 = vmatprep.subr.mxu0 0.0
        %569 = vmatpush1.msra.mxu0 %v541
        %570 = vmatprep.subr.mxu0 0.0
        %571 = vmatpush1.msra.mxu0 %v542
        %572 = vmatprep.subr.mxu0 0.0
        %573 = vmatpush1.msra.mxu0 %v543
        %574 = vmatprep.subr.mxu0 0.0
        %575 = vmatpush1.msra.mxu0 %v544
        %576 = vmatprep.subr.mxu0 0.0
        %577 = vmatpush1.msra.mxu0 %v545
        %578 = vmatprep.subr.mxu0 0.0
        %579 = vmatpush1.msra.mxu0 0.0
        %580 = vmatprep.subr.mxu0 0.0
        %581 = vmatpush1.msra.mxu0 0.0
        %582 = vmatprep.subr.mxu0 0.0
        %583 = vmatpush1.msra.mxu0 0.0
        %584 = vmatprep.subr.mxu0 0.0
        %585 = vmatpush1.msra.mxu0 0.0
        %586 = vmatprep.subr.mxu0 0.0
        %587 = vmatpush1.msra.mxu0 0.0
        %588 = vmatprep.subr.mxu0 0.0
        %589 = vmatpush1.msra.mxu0 0.0
        %590 = vmatprep.subr.mxu0 0.0
        %591 = vmatpush1.msra.mxu0 0.0
        %592 = vmatprep.subr.mxu0 0.0
        %593 = vmatpush1.msra.mxu0 0.0
        %594 = vmatprep.subr.mxu0 0.0
        %595 = vmatpush1.msra.mxu0 0.0
        %596 = vmatprep.subr.mxu0 0.0
        %597 = vmatpush1.msra.mxu0 0.0
        %598 = vmatprep.subr.mxu0 0.0
        %599 = vmatpush1.msra.mxu0 0.0
        %600 = vmatprep.subr.mxu0 0.0
        %601 = vmatpush1.msra.mxu0 0.0
        %602 = vmatprep.subr.mxu0 0.0
        %603 = vmatpush1.msra.mxu0 0.0
        %604 = vmatprep.subr.mxu0 0.0
        %605 = vmatpush1.msra.mxu0 0.0
        %606 = vmatprep.subr.mxu0 0.0
        %607 = vmatpush1.msra.mxu0 0.0
        %608 = vmatprep.subr.mxu0 0.0
        %609 = vmatpush1.msra.mxu0 0.0
        %610 = vmatprep.mubr.f32.mxu0 0.0
        %611 = vmatmul.mubr.f32.gmra.mrb[0].mxu0 %v528
        %v612 = vpop.f32.mrb[0].mxu0
        %v613 = vadd.f32 0.0, %v612
        %v614 = vpop.f32.mrb[0].mxu0
        %615 = vdwg.mxu0
        %v616 = vadd.f32 %v529, %v613
        %v617 = vtanh.pop %v616
        %618 = vst [vmem:[#allocation3] sm:$0xff] %v617
        %s619 = scalar_lea.vmem [#allocation3], 8
        %v620 = vld [vmem:[%s619] sm:$0xff]
        %v621 = vld [vmem:[#allocation10] sm:$0xff]
        %v622 = vld [vmem:[#allocation10 + $0x8] sm:$0xff]
        %v623 = vld [vmem:[#allocation10 + $0x10] sm:$0xff]
        %v624 = vld [vmem:[#allocation10 + $0x18] sm:$0xff]
        %v625 = vld [vmem:[#allocation10 + $0x20] sm:$0xff]
        %v626 = vld [vmem:[#allocation10 + $0x28] sm:$0xff]
        %v627 = vld [vmem:[#allocation10 + $0x30] sm:$0xff]
        %v628 = vld [vmem:[#allocation10 + $0x38] sm:$0xff]
        %v629 = vld [vmem:[#allocation10 + $0x40] sm:$0xff]
        %v630 = vld [vmem:[#allocation10 + $0x48] sm:$0xff]
        %v631 = vld [vmem:[#allocation10 + $0x50] sm:$0xff]
        %v632 = vld [vmem:[#allocation10 + $0x58] sm:$0xff]
        %v633 = vld [vmem:[#allocation10 + $0x60] sm:$0xff]
        %v634 = vld [vmem:[#allocation10 + $0x68] sm:$0xff]
        %v635 = vld [vmem:[#allocation10 + $0x70] sm:$0xff]
        %v636 = vld [vmem:[#allocation10 + $0x78] sm:$0xff]
        %637 = vmatprep.subr.mxu0 0.0
        %638 = vmatpush1.msra.mxu0 %v621
        %639 = vmatprep.subr.mxu0 0.0
        %640 = vmatpush1.msra.mxu0 %v622
        %641 = vmatprep.subr.mxu0 0.0
        %642 = vmatpush1.msra.mxu0 %v623
        %643 = vmatprep.subr.mxu0 0.0
        %644 = vmatpush1.msra.mxu0 %v624
        %645 = vmatprep.subr.mxu0 0.0
        %646 = vmatpush1.msra.mxu0 %v625
        %647 = vmatprep.subr.mxu0 0.0
        %648 = vmatpush1.msra.mxu0 %v626
        %649 = vmatprep.subr.mxu0 0.0
        %650 = vmatpush1.msra.mxu0 %v627
        %651 = vmatprep.subr.mxu0 0.0
        %652 = vmatpush1.msra.mxu0 %v628
        %653 = vmatprep.subr.mxu0 0.0
        %654 = vmatpush1.msra.mxu0 %v629
        %655 = vmatprep.subr.mxu0 0.0
        %656 = vmatpush1.msra.mxu0 %v630
        %657 = vmatprep.subr.mxu0 0.0
        %658 = vmatpush1.msra.mxu0 %v631
        %659 = vmatprep.subr.mxu0 0.0
        %660 = vmatpush1.msra.mxu0 %v632
        %661 = vmatprep.subr.mxu0 0.0
        %662 = vmatpush1.msra.mxu0 %v633
        %663 = vmatprep.subr.mxu0 0.0
        %664 = vmatpush1.msra.mxu0 %v634
        %665 = vmatprep.subr.mxu0 0.0
        %666 = vmatpush1.msra.mxu0 %v635
        %667 = vmatprep.subr.mxu0 0.0
        %668 = vmatpush1.msra.mxu0 %v636
        %669 = vmatprep.subr.mxu0 0.0
        %670 = vmatpush1.msra.mxu0 0.0
        %671 = vmatprep.subr.mxu0 0.0
        %672 = vmatpush1.msra.mxu0 0.0
        %673 = vmatprep.subr.mxu0 0.0
        %674 = vmatpush1.msra.mxu0 0.0
        %675 = vmatprep.subr.mxu0 0.0
        %676 = vmatpush1.msra.mxu0 0.0
        %677 = vmatprep.subr.mxu0 0.0
        %678 = vmatpush1.msra.mxu0 0.0
        %679 = vmatprep.subr.mxu0 0.0
        %680 = vmatpush1.msra.mxu0 0.0
        %681 = vmatprep.subr.mxu0 0.0
        %682 = vmatpush1.msra.mxu0 0.0
        %683 = vmatprep.subr.mxu0 0.0
        %684 = vmatpush1.msra.mxu0 0.0
        %685 = vmatprep.subr.mxu0 0.0
        %686 = vmatpush1.msra.mxu0 0.0
        %687 = vmatprep.subr.mxu0 0.0
        %688 = vmatpush1.msra.mxu0 0.0
        %689 = vmatprep.subr.mxu0 0.0
        %690 = vmatpush1.msra.mxu0 0.0
        %691 = vmatprep.subr.mxu0 0.0
        %692 = vmatpush1.msra.mxu0 0.0
        %693 = vmatprep.subr.mxu0 0.0
        %694 = vmatpush1.msra.mxu0 0.0
        %695 = vmatprep.subr.mxu0 0.0
        %696 = vmatpush1.msra.mxu0 0.0
        %697 = vmatprep.subr.mxu0 0.0
        %698 = vmatpush1.msra.mxu0 0.0
        %699 = vmatprep.subr.mxu0 0.0
        %700 = vmatpush1.msra.mxu0 0.0
        %701 = vmatprep.mubr.f32.mxu0 0.0
        %702 = vmatmul.mubr.f32.gmra.mrb[0].mxu0 %v617
        %v703 = vpop.f32.mrb[0].mxu0
        %v704 = vadd.f32 0.0, %v703
        %v705 = vpop.f32.mrb[0].mxu0
        %706 = vdwg.mxu0
        %v707 = vadd.f32 %v620, %v704
        %v708 = vtanh.pop %v707
        %709 = vst [vmem:[%s619] sm:$0xff] %v708
        %s710 = scalar_lea.vmem [#allocation3], 16
        %v711 = vld [vmem:[%s710] sm:$0xff]
        %v712 = vld [vmem:[#allocation10] sm:$0xff]
        %v713 = vld [vmem:[#allocation10 + $0x8] sm:$0xff]
        %v714 = vld [vmem:[#allocation10 + $0x10] sm:$0xff]
        %v715 = vld [vmem:[#allocation10 + $0x18] sm:$0xff]
        %v716 = vld [vmem:[#allocation10 + $0x20] sm:$0xff]
        %v717 = vld [vmem:[#allocation10 + $0x28] sm:$0xff]
        %v718 = vld [vmem:[#allocation10 + $0x30] sm:$0xff]
        %v719 = vld [vmem:[#allocation10 + $0x38] sm:$0xff]
        %v720 = vld [vmem:[#allocation10 + $0x40] sm:$0xff]
        %v721 = vld [vmem:[#allocation10 + $0x48] sm:$0xff]
        %v722 = vld [vmem:[#allocation10 + $0x50] sm:$0xff]
        %v723 = vld [vmem:[#allocation10 + $0x58] sm:$0xff]
        %v724 = vld [vmem:[#allocation10 + $0x60] sm:$0xff]
        %v725 = vld [vmem:[#allocation10 + $0x68] sm:$0xff]
        %v726 = vld [vmem:[#allocation10 + $0x70] sm:$0xff]
        %v727 = vld [vmem:[#allocation10 + $0x78] sm:$0xff]
        %728 = vmatprep.subr.mxu0 0.0
        %729 = vmatpush1.msra.mxu0 %v712
        %730 = vmatprep.subr.mxu0 0.0
        %731 = vmatpush1.msra.mxu0 %v713
        %732 = vmatprep.subr.mxu0 0.0
        %733 = vmatpush1.msra.mxu0 %v714
        %734 = vmatprep.subr.mxu0 0.0
        %735 = vmatpush1.msra.mxu0 %v715
        %736 = vmatprep.subr.mxu0 0.0
        %737 = vmatpush1.msra.mxu0 %v716
        %738 = vmatprep.subr.mxu0 0.0
        %739 = vmatpush1.msra.mxu0 %v717
        %740 = vmatprep.subr.mxu0 0.0
        %741 = vmatpush1.msra.mxu0 %v718
        %742 = vmatprep.subr.mxu0 0.0
        %743 = vmatpush1.msra.mxu0 %v719
        %744 = vmatprep.subr.mxu0 0.0
        %745 = vmatpush1.msra.mxu0 %v720
        %746 = vmatprep.subr.mxu0 0.0
        %747 = vmatpush1.msra.mxu0 %v721
        %748 = vmatprep.subr.mxu0 0.0
        %749 = vmatpush1.msra.mxu0 %v722
        %750 = vmatprep.subr.mxu0 0.0
        %751 = vmatpush1.msra.mxu0 %v723
        %752 = vmatprep.subr.mxu0 0.0
        %753 = vmatpush1.msra.mxu0 %v724
        %754 = vmatprep.subr.mxu0 0.0
        %755 = vmatpush1.msra.mxu0 %v725
        %756 = vmatprep.subr.mxu0 0.0
        %757 = vmatpush1.msra.mxu0 %v726
        %758 = vmatprep.subr.mxu0 0.0
        %759 = vmatpush1.msra.mxu0 %v727
        %760 = vmatprep.subr.mxu0 0.0
        %761 = vmatpush1.msra.mxu0 0.0
        %762 = vmatprep.subr.mxu0 0.0
        %763 = vmatpush1.msra.mxu0 0.0
        %764 = vmatprep.subr.mxu0 0.0
        %765 = vmatpush1.msra.mxu0 0.0
        %766 = vmatprep.subr.mxu0 0.0
        %767 = vmatpush1.msra.mxu0 0.0
        %768 = vmatprep.subr.mxu0 0.0
        %769 = vmatpush1.msra.mxu0 0.0
        %770 = vmatprep.subr.mxu0 0.0
        %771 = vmatpush1.msra.mxu0 0.0
        %772 = vmatprep.subr.mxu0 0.0
        %773 = vmatpush1.msra.mxu0 0.0
        %774 = vmatprep.subr.mxu0 0.0
        %775 = vmatpush1.msra.mxu0 0.0
        %776 = vmatprep.subr.mxu0 0.0
        %777 = vmatpush1.msra.mxu0 0.0
        %778 = vmatprep.subr.mxu0 0.0
        %779 = vmatpush1.msra.mxu0 0.0
        %780 = vmatprep.subr.mxu0 0.0
        %781 = vmatpush1.msra.mxu0 0.0
        %782 = vmatprep.subr.mxu0 0.0
        %783 = vmatpush1.msra.mxu0 0.0
        %784 = vmatprep.subr.mxu0 0.0
        %785 = vmatpush1.msra.mxu0 0.0
        %786 = vmatprep.subr.mxu0 0.0
        %787 = vmatpush1.msra.mxu0 0.0
        %788 = vmatprep.subr.mxu0 0.0
        %789 = vmatpush1.msra.mxu0 0.0
        %790 = vmatprep.subr.mxu0 0.0
        %791 = vmatpush1.msra.mxu0 0.0
        %792 = vmatprep.mubr.f32.mxu0 0.0
        %793 = vmatmul.mubr.f32.gmra.mrb[0].mxu0 %v708
        %v794 = vpop.f32.mrb[0].mxu0
        %v795 = vadd.f32 0.0, %v794
        %v796 = vpop.f32.mrb[0].mxu0
        %797 = vdwg.mxu0
        %v798 = vadd.f32 %v711, %v795
        %v799 = vtanh.pop %v798
        %800 = vst [vmem:[%s710] sm:$0xff] %v799
        %s801 = scalar_lea.vmem [#allocation3], 24
        %v802 = vld [vmem:[%s801] sm:$0xff]
        %v803 = vld [vmem:[#allocation10] sm:$0xff]
        %v804 = vld [vmem:[#allocation10 + $0x8] sm:$0xff]
        %v805 = vld [vmem:[#allocation10 + $0x10] sm:$0xff]
        %v806 = vld [vmem:[#allocation10 + $0x18] sm:$0xff]
        %v807 = vld [vmem:[#allocation10 + $0x20] sm:$0xff]
        %v808 = vld [vmem:[#allocation10 + $0x28] sm:$0xff]
        %v809 = vld [vmem:[#allocation10 + $0x30] sm:$0xff]
        %v810 = vld [vmem:[#allocation10 + $0x38] sm:$0xff]
        %v811 = vld [vmem:[#allocation10 + $0x40] sm:$0xff]
        %v812 = vld [vmem:[#allocation10 + $0x48] sm:$0xff]
        %v813 = vld [vmem:[#allocation10 + $0x50] sm:$0xff]
        %v814 = vld [vmem:[#allocation10 + $0x58] sm:$0xff]
        %v815 = vld [vmem:[#allocation10 + $0x60] sm:$0xff]
        %v816 = vld [vmem:[#allocation10 + $0x68] sm:$0xff]
        %v817 = vld [vmem:[#allocation10 + $0x70] sm:$0xff]
        %v818 = vld [vmem:[#allocation10 + $0x78] sm:$0xff]
        %819 = vmatprep.subr.mxu0 0.0
        %820 = vmatpush1.msra.mxu0 %v803
        %821 = vmatprep.subr.mxu0 0.0
        %822 = vmatpush1.msra.mxu0 %v804
        %823 = vmatprep.subr.mxu0 0.0
        %824 = vmatpush1.msra.mxu0 %v805
        %825 = vmatprep.subr.mxu0 0.0
        %826 = vmatpush1.msra.mxu0 %v806
        %827 = vmatprep.subr.mxu0 0.0
        %828 = vmatpush1.msra.mxu0 %v807
        %829 = vmatprep.subr.mxu0 0.0
        %830 = vmatpush1.msra.mxu0 %v808
        %831 = vmatprep.subr.mxu0 0.0
        %832 = vmatpush1.msra.mxu0 %v809
        %833 = vmatprep.subr.mxu0 0.0
        %834 = vmatpush1.msra.mxu0 %v810
        %835 = vmatprep.subr.mxu0 0.0
        %836 = vmatpush1.msra.mxu0 %v811
        %837 = vmatprep.subr.mxu0 0.0
        %838 = vmatpush1.msra.mxu0 %v812
        %839 = vmatprep.subr.mxu0 0.0
        %840 = vmatpush1.msra.mxu0 %v813
        %841 = vmatprep.subr.mxu0 0.0
        %842 = vmatpush1.msra.mxu0 %v814
        %843 = vmatprep.subr.mxu0 0.0
        %844 = vmatpush1.msra.mxu0 %v815
        %845 = vmatprep.subr.mxu0 0.0
        %846 = vmatpush1.msra.mxu0 %v816
        %847 = vmatprep.subr.mxu0 0.0
        %848 = vmatpush1.msra.mxu0 %v817
        %849 = vmatprep.subr.mxu0 0.0
        %850 = vmatpush1.msra.mxu0 %v818
        %851 = vmatprep.subr.mxu0 0.0
        %852 = vmatpush1.msra.mxu0 0.0
        %853 = vmatprep.subr.mxu0 0.0
        %854 = vmatpush1.msra.mxu0 0.0
        %855 = vmatprep.subr.mxu0 0.0
        %856 = vmatpush1.msra.mxu0 0.0
        %857 = vmatprep.subr.mxu0 0.0
        %858 = vmatpush1.msra.mxu0 0.0
        %859 = vmatprep.subr.mxu0 0.0
        %860 = vmatpush1.msra.mxu0 0.0
        %861 = vmatprep.subr.mxu0 0.0
        %862 = vmatpush1.msra.mxu0 0.0
        %863 = vmatprep.subr.mxu0 0.0
        %864 = vmatpush1.msra.mxu0 0.0
        %865 = vmatprep.subr.mxu0 0.0
        %866 = vmatpush1.msra.mxu0 0.0
        %867 = vmatprep.subr.mxu0 0.0
        %868 = vmatpush1.msra.mxu0 0.0
        %869 = vmatprep.subr.mxu0 0.0
        %870 = vmatpush1.msra.mxu0 0.0
        %871 = vmatprep.subr.mxu0 0.0
        %872 = vmatpush1.msra.mxu0 0.0
        %873 = vmatprep.subr.mxu0 0.0
        %874 = vmatpush1.msra.mxu0 0.0
        %875 = vmatprep.subr.mxu0 0.0
        %876 = vmatpush1.msra.mxu0 0.0
        %877 = vmatprep.subr.mxu0 0.0
        %878 = vmatpush1.msra.mxu0 0.0
        %879 = vmatprep.subr.mxu0 0.0
        %880 = vmatpush1.msra.mxu0 0.0
        %881 = vmatprep.subr.mxu0 0.0
        %882 = vmatpush1.msra.mxu0 0.0
        %883 = vmatprep.mubr.f32.mxu0 0.0
        %884 = vmatmul.mubr.f32.gmra.mrb[0].mxu0 %v799
        %v885 = vpop.f32.mrb[0].mxu0
        %v886 = vadd.f32 0.0, %v885
        %v887 = vpop.f32.mrb[0].mxu0
        %888 = vdwg.mxu0
        %v889 = vadd.f32 %v802, %v886
        %v890 = vtanh.pop %v889
        %891 = vst [vmem:[%s801] sm:$0xff] %v890
        %892 = vst [vmem:[#allocation2] sm:$0xff] %v890
        %893 = vst [vmem:[#allocation17] sm:$0xff] %v890
        %v894 = vld [vmem:[#allocation3] sm:$0xff]
        %v895 = vld [vmem:[#allocation3 + $0x8] sm:$0xff]
        %v896 = vld [vmem:[#allocation3 + $0x10] sm:$0xff]
        %v897 = vld [vmem:[#allocation3 + $0x18] sm:$0xff]
        %v898 = vld [vmem:[#allocation13] sm:$0xff]
        %v899 = vld [vmem:[#allocation13 + $0x8] sm:$0xff]
        %v900 = vld [vmem:[#allocation13 + $0x10] sm:$0xff]
        %v901 = vld [vmem:[#allocation13 + $0x18] sm:$0xff]
        %v902 = vld [vmem:[#allocation13 + $0x20] sm:$0xff]
        %v903 = vld [vmem:[#allocation13 + $0x28] sm:$0xff]
        %v904 = vld [vmem:[#allocation13 + $0x30] sm:$0xff]
        %v905 = vld [vmem:[#allocation13 + $0x38] sm:$0xff]
        %v906 = vld [vmem:[#allocation13 + $0x40] sm:$0xff]
        %v907 = vld [vmem:[#allocation13 + $0x48] sm:$0xff]
        %v908 = vld [vmem:[#allocation13 + $0x50] sm:$0xff]
        %v909 = vld [vmem:[#allocation13 + $0x58] sm:$0xff]
        %v910 = vld [vmem:[#allocation13 + $0x60] sm:$0xff]
        %v911 = vld [vmem:[#allocation13 + $0x68] sm:$0xff]
        %v912 = vld [vmem:[#allocation13 + $0x70] sm:$0xff]
        %v913 = vld [vmem:[#allocation13 + $0x78] sm:$0xff]
        %v914 = vld [vmem:[#allocation15] sm:$0x1]
        %v916 = vlaneseq
        %v917 = vshrl.u32 %v916, 7
        %v918 = vsub.s32 0, %v917
        %v919 = vrot.slane %v914, %v918
        %921 = vmatprep.subr.mxu0 0.0
        %922 = vmatpush1.msra.mxu0 %v898
        %923 = vmatprep.subr.mxu0 0.0
        %924 = vmatpush1.msra.mxu0 %v899
        %925 = vmatprep.subr.mxu0 0.0
        %926 = vmatpush1.msra.mxu0 %v900
        %927 = vmatprep.subr.mxu0 0.0
        %928 = vmatpush1.msra.mxu0 %v901
        %929 = vmatprep.subr.mxu0 0.0
        %930 = vmatpush1.msra.mxu0 %v902
        %931 = vmatprep.subr.mxu0 0.0
        %932 = vmatpush1.msra.mxu0 %v903
        %933 = vmatprep.subr.mxu0 0.0
        %934 = vmatpush1.msra.mxu0 %v904
        %935 = vmatprep.subr.mxu0 0.0
        %936 = vmatpush1.msra.mxu0 %v905
        %937 = vmatprep.subr.mxu0 0.0
        %938 = vmatpush1.msra.mxu0 %v906
        %939 = vmatprep.subr.mxu0 0.0
        %940 = vmatpush1.msra.mxu0 %v907
        %941 = vmatprep.subr.mxu0 0.0
        %942 = vmatpush1.msra.mxu0 %v908
        %943 = vmatprep.subr.mxu0 0.0
        %944 = vmatpush1.msra.mxu0 %v909
        %945 = vmatprep.subr.mxu0 0.0
        %946 = vmatpush1.msra.mxu0 %v910
        %947 = vmatprep.subr.mxu0 0.0
        %948 = vmatpush1.msra.mxu0 %v911
        %949 = vmatprep.subr.mxu0 0.0
        %950 = vmatpush1.msra.mxu0 %v912
        %951 = vmatprep.subr.mxu0 0.0
        %952 = vmatpush1.msra.mxu0 %v913
        %953 = vmatprep.subr.mxu0 0.0
        %954 = vmatpush1.msra.mxu0 0.0
        %955 = vmatprep.subr.mxu0 0.0
        %956 = vmatpush1.msra.mxu0 0.0
        %957 = vmatprep.subr.mxu0 0.0
        %958 = vmatpush1.msra.mxu0 0.0
        %959 = vmatprep.subr.mxu0 0.0
        %960 = vmatpush1.msra.mxu0 0.0
        %961 = vmatprep.subr.mxu0 0.0
        %962 = vmatpush1.msra.mxu0 0.0
        %963 = vmatprep.subr.mxu0 0.0
        %964 = vmatpush1.msra.mxu0 0.0
        %965 = vmatprep.subr.mxu0 0.0
        %966 = vmatpush1.msra.mxu0 0.0
        %967 = vmatprep.subr.mxu0 0.0
        %968 = vmatpush1.msra.mxu0 0.0
        %969 = vmatprep.subr.mxu0 0.0
        %970 = vmatpush1.msra.mxu0 0.0
        %971 = vmatprep.subr.mxu0 0.0
        %972 = vmatpush1.msra.mxu0 0.0
        %973 = vmatprep.subr.mxu0 0.0
        %974 = vmatpush1.msra.mxu0 0.0
        %975 = vmatprep.subr.mxu0 0.0
        %976 = vmatpush1.msra.mxu0 0.0
        %977 = vmatprep.subr.mxu0 0.0
        %978 = vmatpush1.msra.mxu0 0.0
        %979 = vmatprep.subr.mxu0 0.0
        %980 = vmatpush1.msra.mxu0 0.0
        %981 = vmatprep.subr.mxu0 0.0
        %982 = vmatpush1.msra.mxu0 0.0
        %983 = vmatprep.subr.mxu0 0.0
        %984 = vmatpush1.msra.mxu0 0.0
        %985 = vmatprep.mubr.f32.mxu0 0.0
        %986 = vmatmul.mubr.f32.gmra.mrb[0].mxu0 %v894
        %v987 = vpop.f32.mrb[0].mxu0
        %v988 = vadd.f32 %v919, %v987
        %v989 = vpop.f32.mrb[0].mxu0
        %990 = vmatprep.mubr.f32.mxu0 0.0
        %991 = vmatmul.mubr.f32.gmra.mrb[0].mxu0 %v895
        %v992 = vpop.f32.mrb[0].mxu0
        %v993 = vadd.f32 %v919, %v992
        %v994 = vpop.f32.mrb[0].mxu0
        %995 = vmatprep.mubr.f32.mxu0 0.0
        %996 = vmatmul.mubr.f32.gmra.mrb[0].mxu0 %v896
        %v997 = vpop.f32.mrb[0].mxu0
        %v998 = vadd.f32 %v919, %v997
        %v999 = vpop.f32.mrb[0].mxu0
        %1000 = vmatprep.mubr.f32.mxu0 0.0
        %1001 = vmatmul.mubr.f32.gmra.mrb[0].mxu0 %v897
        %v1002 = vpop.f32.mrb[0].mxu0
        %v1003 = vadd.f32 %v919, %v1002
        %v1004 = vpop.f32.mrb[0].mxu0
        %1005 = vdwg.mxu0
        %vm1006 = vcmask 64512
        %1007 = vst.msk [vmem:[%s399] sm:$0xff] %vm1006, %v988
        %1008 = vst.msk [vmem:[%s399 + $0x8] sm:$0xff] %vm1006, %v993
        %1009 = vst.msk [vmem:[%s399 + $0x10] sm:$0xff] %vm1006, %v998
        %1010 = vst.msk [vmem:[%s399 + $0x18] sm:$0xff] %vm1006, %v1003
        %s1011 = sand.u32 %s190, 1
        %s1012 = scalar_lea.sflag [#allocation6], %s1011
        %s1013 = sand.u32 %s190, 1
        %s1014 = smul.addr %s1013, 32
        %s1015 = scalar_lea.vmem [#allocation16], %s1014
        // Predicated region
        $region81: #{tpu_custom_call.1} parent=47 // pred_check
          %p1016 = pneg %p200
        $region82: #{tpu_custom_call.1} parent=47 // pred_check_branch
          %1018 = sbr.rel (%p1016) target = $region84
        $region83: #{tpu_custom_call.1} parent=47 // pred_region
          %s1019 = smul.u32 4, %s30
          %s1021 = ssub.s32 512, 512
          %1022 = vsyncadd %s1012, %s1021
          %s1023 = smul.addr %s1019, 128
          %s1024 = scalar_lea.hbm %s7, %s1023
          %s1025 = sshll.u32 %s1015, 4
          %s1026 = int_to_ptr.vmem [resolvable:$true] %s1025
          %1031 = dma.vmem_to_hbm [thread:$0]  %s1026, 512, %s1024, %s1012, 128, 128, 8
        $region84: #{tpu_custom_call.1} parent=47 // pred_fallthru
          _
        // Predicated region
        $region85: #{tpu_custom_call.1} parent=47 // pred_check
          %p1032 = pneg %p221
        $region86: #{tpu_custom_call.1} parent=47 // pred_check_branch
          %1034 = sbr.rel (%p1032) target = $region88
        $region87: #{tpu_custom_call.1} parent=47 // pred_region
          %s1036 = ssub.s32 128, 128
          %1037 = vsyncadd [#allocation18], %s1036
          %s1039 = sshll.u32 [#allocation17], 4
          %s1040 = int_to_ptr.vmem [resolvable:$true] %s1039
          %1042 = dma.vmem_to_hbm [thread:$0]  %s1040, 128, %s8, [#allocation18]
        $region88: #{tpu_custom_call.1} parent=47 // pred_fallthru
          _
        // Predicated region
        $region89: #{tpu_custom_call.1} parent=47 // pred_check
          %p1043 = pneg %p221
        $region90: #{tpu_custom_call.1} parent=47 // pred_check_branch
          %1045 = sbr.rel (%p1043) target = $region92
        $region91: #{tpu_custom_call.1} parent=47 // pred_region
          %1046 = dma.done [#allocation18], 128
        $region92: #{tpu_custom_call.1} parent=47 // pred_fallthru
          _
      $region48: #{tpu_custom_call.1} parent=5 // pred_fallthru
        _
      %p1047 = scmp.le.s32.totalorder 2, %s25
      // Predicated region
      $region93: #{tpu_custom_call.1} parent=5 // pred_check
        %p1048 = pneg %p1047
      $region94: #{tpu_custom_call.1} parent=5 // pred_check_branch
        %1050 = sbr.rel (%p1048) target = $region96
      $region95: #{tpu_custom_call.1} parent=5 // pred_region
        %s1051 = ssub.s32 %s25, 2
        // Predicated region
        $region97: #{tpu_custom_call.1} parent=95 // pred_check
          %p1052 = pneg %p206
        $region98: #{tpu_custom_call.1} parent=95 // pred_check_branch
          %1054 = sbr.rel (%p1052) target = $region100
        $region99: #{tpu_custom_call.1} parent=95 // pred_region
          %s1055 = sand.u32 %s191, 1
          %s1056 = scalar_lea.sflag [#allocation6], %s1055
          %s1057 = sand.u32 %s191, 1
          %s1058 = smul.addr %s1057, 32
          %s1059 = scalar_lea.vmem [#allocation16], %s1058
          %1060 = dma.done %s1056, 512
        $region100: #{tpu_custom_call.1} parent=95 // pred_fallthru
          _
      $region96: #{tpu_custom_call.1} parent=5 // pred_fallthru
        _
    $region6: #{tpu_custom_call.1} parent=1 // loop_footer
      %s29 = sadd.s32 1, %s25
    $region7: #{tpu_custom_call.1} parent=1 // loop_footer_branch
      %24 = sbr.rel target = $region3
    $region8: #{tpu_custom_call.1} parent=1 // loop_exit
      _
    %1061 = vsyncpa [#allocation5], 1
    %s1062 = scalar_lea.sflag [#allocation5], 1
    %1063 = vsyncpa %s1062, 1
    %1064 = vsyncpa [#allocation8], 1
    %1065 = vsyncpa [#allocation11], 1
    %1066 = vsyncpa [#allocation14], 1
    %1067 = vsyncpa [#allocation6], 1
    %s1068 = scalar_lea.sflag [#allocation6], 1
    %1069 = vsyncpa %s1068, 1
    %1070 = vsyncpa [#allocation18], 1

</llo_original>
